<compile_context>
chip_gen: v7x
topology: tpu7x:2x2x1
jax: 0.10.0
libtpu: 0.0.40
codegen_flags: <defaults>
</compile_context>

<pallas_src>
import functools
import math

import jax
import jax.numpy as jnp
from jax.experimental import pallas as pl
from jax.experimental.pallas import tpu as pltpu


def _round_up(x, m):
    return ((x + m - 1) // m) * m


def _residual_mlp_kernel(x_ref, w1_ref, b1_ref, w2_ref, b2_ref, w3_ref, b3_ref,
                         o_ref):
    """o = x[:S, :] + L3(relu(L2(relu(L1(x)))))   (feature-major, batch on lanes)."""
    x = x_ref[...]                                   # (S+A, TB), input dtype
    dot_dt = w1_ref.dtype                            # MXU operand dtype (bf16 or f32)

    # Layer 1: single fused [state|action] contraction (K = S+A).
    h1 = jnp.dot(w1_ref[...], x.astype(dot_dt), preferred_element_type=jnp.float32)
    h1 = jnp.maximum(h1 + b1_ref[...], 0.0)          # (H, TB) f32, bias lane-broadcast

    # Layer 2.
    h2 = jnp.dot(w2_ref[...], h1.astype(dot_dt), preferred_element_type=jnp.float32)
    h2 = jnp.maximum(h2 + b2_ref[...], 0.0)          # (H, TB)

    # Layer 3 -> delta^T  (S, TB).
    d = jnp.dot(w3_ref[...], h2.astype(dot_dt), preferred_element_type=jnp.float32)
    d = d + b3_ref[...]

    # state^T is the first S sublanes of the input block: static slice, no
    # transpose / identity matmul needed.  Residual add in f32, lane-dense store.
    s = x[: o_ref.shape[0], :].astype(jnp.float32)
    o_ref[...] = (s + d).astype(o_ref.dtype)


def residual_dynamics_forward_t(x_t, params, state_dim, *, tb_max=8192,
                                dot_dtype=jnp.bfloat16):
    """Feature-major forward pass.

    x_t: (state_dim + action_dim, B) = [state | action]^T.
    Returns next_state^T of shape (state_dim, B).
    Rollout loops should call this directly to stay feature-major end-to-end.
    """
    w1, b1, w2, b2, w3, b3 = params
    in_dim, B = x_t.shape
    hidden_dim = w1.shape[0]
    assert w1.shape == (hidden_dim, in_dim)
    assert w3.shape == (state_dim, hidden_dim)

    # ---- batch tiling: full-lane tiles, no ragged last tile, and >= 2 grid
    #      steps (v7x megacore) whenever there is more than one lane-group. ----
    tb_max = max(128, _round_up(tb_max, 128))
    b128 = _round_up(B, 128)
    steps = 1 if b128 <= 128 else max(2, pl.cdiv(b128, tb_max))
    tb = _round_up(pl.cdiv(b128, steps), 128)        # <= tb_max, multiple of 128
    b_pad = steps * tb
    if b_pad != B:
        x_t = jnp.pad(x_t, ((0, 0), (0, b_pad - B)))

    # Weights streamed from HBM in the MXU operand dtype; biases stay f32 columns.
    dt = jnp.dtype(dot_dtype)
    w1c = w1.astype(dt)
    w2c = w2.astype(dt)
    w3c = w3.astype(dt)
    b1c = b1.reshape(hidden_dim, 1).astype(jnp.float32)
    b2c = b2.reshape(hidden_dim, 1).astype(jnp.float32)
    b3c = b3.reshape(state_dim, 1).astype(jnp.float32)

    # Constant index maps -> weight/bias blocks are DMA'd once and stay resident
    # across grid steps.
    # TODO(synk): pipeline_mode=pl.Buffered(1) on these constant specs would also
    # drop their (few-KiB) second pipeline buffer; skipped as a micro-opt.
    const = lambda shape: pl.BlockSpec(shape, lambda i: (0, 0))

    flops = 2 * b_pad * (in_dim * hidden_dim + hidden_dim * hidden_dim
                         + hidden_dim * state_dim)
    bytes_accessed = (x_t.dtype.itemsize * in_dim * b_pad
                      + 4 * state_dim * b_pad
                      + dt.itemsize * (in_dim * hidden_dim
                                       + hidden_dim * hidden_dim
                                       + hidden_dim * state_dim)
                      + 4 * (2 * hidden_dim + state_dim))

    out_t = pl.pallas_call(
        _residual_mlp_kernel,
        out_shape=jax.ShapeDtypeStruct((state_dim, b_pad), x_t.dtype),
        grid=(steps,),
        in_specs=[
            pl.BlockSpec((in_dim, tb), lambda i: (0, i)),      # [state|action]^T tile
            const((hidden_dim, in_dim)),                        # W1
            const((hidden_dim, 1)),                             # b1
            const((hidden_dim, hidden_dim)),                    # W2
            const((hidden_dim, 1)),                             # b2
            const((state_dim, hidden_dim)),                     # W3
            const((state_dim, 1)),                              # b3
        ],
        out_specs=pl.BlockSpec((state_dim, tb), lambda i: (0, i)),
        compiler_params=pltpu.CompilerParams(
            dimension_semantics=("parallel",)),
        cost_estimate=pl.CostEstimate(
            flops=flops, transcendentals=0, bytes_accessed=bytes_accessed),
    )(x_t, w1c, b1c, w2c, b2c, w3c, b3c)

    return out_t[:, :B]


def residual_dynamics_forward(state, action, params, *, tb_max=8192,
                              dot_dtype=jnp.bfloat16):
    """Batch-major API matching ResidualDynamicsModel.forward:
    state (..., state_dim), action (..., action_dim) -> next_state (..., state_dim).
    params are in PyTorch nn.Linear layout: w (out, in), b (out,).

    The concat+transpose in and the transpose back out are layout plumbing
    (one HBM pass each); callers that can stay feature-major (e.g. rollout
    loops) should use residual_dynamics_forward_t instead.
    """
    state_dim = state.shape[-1]
    action_dim = action.shape[-1]
    lead_shape = state.shape[:-1]
    B = math.prod(lead_shape) if lead_shape else 1

    s2d = state.reshape(B, state_dim)
    a2d = action.reshape(B, action_dim)
    x_t = jnp.concatenate([s2d, a2d], axis=-1).T      # (S+A, B), feature-major

    out_t = residual_dynamics_forward_t(x_t, params, state_dim,
                                        tb_max=tb_max, dot_dtype=dot_dtype)
    return out_t.T.reshape(*lead_shape, state_dim)


def init_params(key, state_dim, action_dim, hidden_dim, dtype=jnp.float32):
    """nn.Linear-style init, PyTorch layout: w (out, in), b (out,)."""
    def linear(k, fan_in, fan_out):
        kw, kb = jax.random.split(k)
        bound = 1.0 / math.sqrt(fan_in)
        w = jax.random.uniform(kw, (fan_out, fan_in), dtype, -bound, bound)
        b = jax.random.uniform(kb, (fan_out,), dtype, -bound, bound)
        return w, b

    k1, k2, k3 = jax.random.split(key, 3)
    in_dim = state_dim + action_dim
    w1, b1 = linear(k1, in_dim, hidden_dim)
    w2, b2 = linear(k2, hidden_dim, hidden_dim)
    w3, b3 = linear(k3, hidden_dim, state_dim)
    return (w1, b1, w2, b2, w3, b3)


def reference_forward(state, action, params):
    """Plain-JAX reference, identical math to the PyTorch module (f32)."""
    w1, b1, w2, b2, w3, b3 = params
    x = jnp.concatenate([state, action], axis=-1)
    h = jax.nn.relu(x @ w1.T + b1)
    h = jax.nn.relu(h @ w2.T + b2)
    delta = h @ w3.T + b3
    return state + delta


if __name__ == "__main__":
    state_dim, action_dim, hidden_dim = 4, 4, 32
    batch, seq = 2, 8                      # exercise the (..., dim) leading-dims contract

    key = jax.random.PRNGKey(0)
    kp, ks, ka = jax.random.split(key, 3)

    params = init_params(kp, state_dim, action_dim, hidden_dim)
    state = jax.random.normal(ks, (batch, seq, state_dim), jnp.float32)
    action = jax.random.normal(ka, (batch, seq, action_dim), jnp.float32)

    ref = reference_forward(state, action, params)

    # Exact-semantics check: f32 MXU operands must match the f32 reference.
    fwd_f32 = jax.jit(functools.partial(residual_dynamics_forward,
                                        dot_dtype=jnp.float32))
    out_f32 = jax.block_until_ready(fwd_f32(state, action, params))
    assert out_f32.shape == (batch, seq, state_dim), out_f32.shape
    assert jnp.allclose(out_f32, ref, atol=1e-4, rtol=1e-4), "f32 kernel mismatch"

    # Default fast path: bf16 MXU operands, f32 accumulation (looser tolerance).
    fwd = jax.jit(residual_dynamics_forward)
    out = jax.block_until_ready(fwd(state, action, params))
    assert out.shape == (batch, seq, state_dim), out.shape
    assert jnp.allclose(out, ref, atol=5e-2, rtol=5e-2), "bf16 kernel mismatch"

    print("KERNEL_OK")
</pallas_src>

<mosaic_0001>
module attributes {stable_mosaic.version = 11 : i64} {
  func.func @_residual_mlp_kernel(%arg0: i32, %arg1: memref<8x128xf32, #tpu.memory_space<vmem>>, %arg2: memref<32x8xf32, #tpu.memory_space<vmem>>, %arg3: memref<32x1xf32, #tpu.memory_space<vmem>>, %arg4: memref<32x32xf32, #tpu.memory_space<vmem>>, %arg5: memref<32x1xf32, #tpu.memory_space<vmem>>, %arg6: memref<4x32xf32, #tpu.memory_space<vmem>>, %arg7: memref<4x1xf32, #tpu.memory_space<vmem>>, %arg8: memref<4x128xf32, #tpu.memory_space<vmem>>) attributes {dimension_semantics = [#tpu.dimension_semantics<parallel>], iteration_bounds = array<i64: 1>, scalar_prefetch = 0 : i64, scratch_operands = 0 : i64, tpu.core_type = #tpu.core_type<tc>, window_params = [{transform_indices = @transform_0, window_bounds = array<i64: 8, 128>}, {pipeline_mode = #tpu.pipeline_mode<synchronous>, transform_indices = @transform_1, window_bounds = array<i64: 32, 8>}, {pipeline_mode = #tpu.pipeline_mode<synchronous>, transform_indices = @transform_2, window_bounds = array<i64: 32, 1>}, {pipeline_mode = #tpu.pipeline_mode<synchronous>, transform_indices = @transform_3, window_bounds = array<i64: 32, 32>}, {pipeline_mode = #tpu.pipeline_mode<synchronous>, transform_indices = @transform_4, window_bounds = array<i64: 32, 1>}, {pipeline_mode = #tpu.pipeline_mode<synchronous>, transform_indices = @transform_5, window_bounds = array<i64: 4, 32>}, {pipeline_mode = #tpu.pipeline_mode<synchronous>, transform_indices = @transform_6, window_bounds = array<i64: 4, 1>}, {transform_indices = @transform_7, window_bounds = array<i64: 4, 128>}]} {
    %c0 = arith.constant 0 : index
    %c0_0 = arith.constant 0 : index
    %0 = vector.load %arg1[%c0, %c0_0] : memref<8x128xf32, #tpu.memory_space<vmem>>, vector<8x128xf32>
    %c0_1 = arith.constant 0 : index
    %c0_2 = arith.constant 0 : index
    %1 = vector.load %arg2[%c0_1, %c0_2] : memref<32x8xf32, #tpu.memory_space<vmem>>, vector<32x8xf32>
    %cst = arith.constant dense<0.000000e+00> : vector<32x128xf32>
    %2 = tpu.matmul %1, %0, %cst {dimension_numbers = #tpu.dot_dimension_numbers<[1], [0], [0], [1], [0, 0, 1, 1], [], []>} : vector<32x8xf32>, vector<8x128xf32>, vector<32x128xf32> -> vector<32x128xf32>
    %c0_3 = arith.constant 0 : index
    %c0_4 = arith.constant 0 : index
    %3 = vector.load %arg3[%c0_3, %c0_4] : memref<32x1xf32, #tpu.memory_space<vmem>>, vector<32x1xf32>
    %4 = vector.broadcast %3 : vector<32x1xf32> to vector<32x128xf32>
    %5 = arith.addf %2, %4 : vector<32x128xf32>
    %cst_5 = arith.constant 0.000000e+00 : f32
    %6 = vector.broadcast %cst_5 : f32 to vector<32x128xf32>
    %7 = arith.maximumf %5, %6 : vector<32x128xf32>
    %c0_6 = arith.constant 0 : index
    %c0_7 = arith.constant 0 : index
    %8 = vector.load %arg4[%c0_6, %c0_7] : memref<32x32xf32, #tpu.memory_space<vmem>>, vector<32x32xf32>
    %cst_8 = arith.constant dense<0.000000e+00> : vector<32x128xf32>
    %9 = tpu.matmul %8, %7, %cst_8 {dimension_numbers = #tpu.dot_dimension_numbers<[1], [0], [0], [1], [0, 0, 1, 1], [], []>} : vector<32x32xf32>, vector<32x128xf32>, vector<32x128xf32> -> vector<32x128xf32>
    %c0_9 = arith.constant 0 : index
    %c0_10 = arith.constant 0 : index
    %10 = vector.load %arg5[%c0_9, %c0_10] : memref<32x1xf32, #tpu.memory_space<vmem>>, vector<32x1xf32>
    %11 = vector.broadcast %10 : vector<32x1xf32> to vector<32x128xf32>
    %12 = arith.addf %9, %11 : vector<32x128xf32>
    %cst_11 = arith.constant 0.000000e+00 : f32
    %13 = vector.broadcast %cst_11 : f32 to vector<32x128xf32>
    %14 = arith.maximumf %12, %13 : vector<32x128xf32>
    %c0_12 = arith.constant 0 : index
    %c0_13 = arith.constant 0 : index
    %15 = vector.load %arg6[%c0_12, %c0_13] : memref<4x32xf32, #tpu.memory_space<vmem>>, vector<4x32xf32>
    %cst_14 = arith.constant dense<0.000000e+00> : vector<4x128xf32>
    %16 = tpu.matmul %15, %14, %cst_14 {dimension_numbers = #tpu.dot_dimension_numbers<[1], [0], [0], [1], [0, 0, 1, 1], [], []>} : vector<4x32xf32>, vector<32x128xf32>, vector<4x128xf32> -> vector<4x128xf32>
    %c0_15 = arith.constant 0 : index
    %c0_16 = arith.constant 0 : index
    %17 = vector.load %arg7[%c0_15, %c0_16] : memref<4x1xf32, #tpu.memory_space<vmem>>, vector<4x1xf32>
    %18 = vector.broadcast %17 : vector<4x1xf32> to vector<4x128xf32>
    %19 = arith.addf %16, %18 : vector<4x128xf32>
    %20 = vector.extract_strided_slice %0 {offsets = [0, 0], sizes = [4, 128], strides = [1, 1]} : vector<8x128xf32> to vector<4x128xf32>
    %21 = arith.addf %20, %19 : vector<4x128xf32>
    %c0_17 = arith.constant 0 : index
    %c0_18 = arith.constant 0 : index
    %22 = vector.load %arg8[%c0_17, %c0_18] : memref<4x128xf32, #tpu.memory_space<vmem>>, vector<4x128xf32>
    tpu.vector_store %arg8[%c0_17, %c0_18], %21 {strides = array<i32>} : memref<4x128xf32, #tpu.memory_space<vmem>>, vector<4x128xf32>,
    return
  }
  func.func @transform_0(%arg0: i32) -> (i32, i32) {
    %c0_i32 = arith.constant 0 : i32
    %c0_i32_0 = arith.constant 0 : i32
    return %c0_i32, %arg0 : i32, i32
  }
  func.func @transform_1(%arg0: i32) -> (i32, i32) {
    %c0_i32 = arith.constant 0 : i32
    %c0_i32_0 = arith.constant 0 : i32
    %c0_i32_1 = arith.constant 0 : i32
    return %c0_i32, %c0_i32_0 : i32, i32
  }
  func.func @transform_2(%arg0: i32) -> (i32, i32) {
    %c0_i32 = arith.constant 0 : i32
    %c0_i32_0 = arith.constant 0 : i32
    %c0_i32_1 = arith.constant 0 : i32
    return %c0_i32, %c0_i32_0 : i32, i32
  }
  func.func @transform_3(%arg0: i32) -> (i32, i32) {
    %c0_i32 = arith.constant 0 : i32
    %c0_i32_0 = arith.constant 0 : i32
    %c0_i32_1 = arith.constant 0 : i32
    return %c0_i32, %c0_i32_0 : i32, i32
  }
  func.func @transform_4(%arg0: i32) -> (i32, i32) {
    %c0_i32 = arith.constant 0 : i32
    %c0_i32_0 = arith.constant 0 : i32
    %c0_i32_1 = arith.constant 0 : i32
    return %c0_i32, %c0_i32_0 : i32, i32
  }
  func.func @transform_5(%arg0: i32) -> (i32, i32) {
    %c0_i32 = arith.constant 0 : i32
    %c0_i32_0 = arith.constant 0 : i32
    %c0_i32_1 = arith.constant 0 : i32
    return %c0_i32, %c0_i32_0 : i32, i32
  }
  func.func @transform_6(%arg0: i32) -> (i32, i32) {
    %c0_i32 = arith.constant 0 : i32
    %c0_i32_0 = arith.constant 0 : i32
    %c0_i32_1 = arith.constant 0 : i32
    return %c0_i32, %c0_i32_0 : i32, i32
  }
  func.func @transform_7(%arg0: i32) -> (i32, i32) {
    %c0_i32 = arith.constant 0 : i32
    %c0_i32_0 = arith.constant 0 : i32
    return %c0_i32, %arg0 : i32, i32
  }
}

</mosaic_0001>

<llo_original>
// kernel: residual_dynamics_forward.1
$region0: #{residual_dynamics_forward.1}
  #allocation0 [shape = 'u32[]', space=smem, size = 0x4, offset = 0x4, fixed_abs, tag = 'smem constant byte address 0x4 - core index']
  #allocation1 [shape = 'u32[144,128]{1,0:T(1,128)}', space=vmem, size = 0x12000, scoped, tag = 'internal scratch']
  %s0 = inlined_call_operand.vmem [shape: f32[8,128], index: 0, kind: input, shape index: {}]
  %s1 = inlined_call_operand.vmem [shape: f32[32,8], index: 1, kind: input, shape index: {}]
  %s2 = inlined_call_operand.vmem [shape: f32[32,1], index: 2, kind: input, shape index: {}]
  %s3 = inlined_call_operand.vmem [shape: f32[32,32], index: 3, kind: input, shape index: {}]
  %s4 = inlined_call_operand.vmem [shape: f32[32,1], index: 4, kind: input, shape index: {}]
  %s5 = inlined_call_operand.vmem [shape: f32[4,32], index: 5, kind: input, shape index: {}]
  %s6 = inlined_call_operand.vmem [shape: f32[4,1], index: 6, kind: input, shape index: {}]
  %s7 = inlined_call_operand.vmem [shape: f32[4,128], index: 7, kind: output, shape index: {}]
  %s8 = sld [smem:[#allocation0]]
  $region38: #{residual_dynamics_forward.1} parent=0
    _
  %s10 = ssub.s32 1, %s8
  %s11 = scalar_select 0, %s10, %s8
  // Predicated region
  $region2: #{residual_dynamics_forward.1} parent=0 // pred_check
    _
  $region3: #{residual_dynamics_forward.1} parent=0 // pred_check_branch
    %13 = sbr.rel (0) target = $region5
  $region4: #{residual_dynamics_forward.1} parent=0 // pred_region
    _
  $region5: #{residual_dynamics_forward.1} parent=0 // pred_fallthru
    _
  // Predicated region
  $region6: #{residual_dynamics_forward.1} parent=0 // pred_check
    _
  $region7: #{residual_dynamics_forward.1} parent=0 // pred_check_branch
    %15 = sbr.rel (0) target = $region9
  $region8: #{residual_dynamics_forward.1} parent=0 // pred_region
    _
  $region9: #{residual_dynamics_forward.1} parent=0 // pred_fallthru
    _
  // Predicated region
  $region10: #{residual_dynamics_forward.1} parent=0 // pred_check
    _
  $region11: #{residual_dynamics_forward.1} parent=0 // pred_check_branch
    %17 = sbr.rel (0) target = $region13
  $region12: #{residual_dynamics_forward.1} parent=0 // pred_region
    _
  $region13: #{residual_dynamics_forward.1} parent=0 // pred_fallthru
    _
  // Predicated region
  $region14: #{residual_dynamics_forward.1} parent=0 // pred_check
    _
  $region15: #{residual_dynamics_forward.1} parent=0 // pred_check_branch
    %19 = sbr.rel (0) target = $region17
  $region16: #{residual_dynamics_forward.1} parent=0 // pred_region
    _
  $region17: #{residual_dynamics_forward.1} parent=0 // pred_fallthru
    _
  // Predicated region
  $region18: #{residual_dynamics_forward.1} parent=0 // pred_check
    _
  $region19: #{residual_dynamics_forward.1} parent=0 // pred_check_branch
    %21 = sbr.rel (0) target = $region21
  $region20: #{residual_dynamics_forward.1} parent=0 // pred_region
    _
  $region21: #{residual_dynamics_forward.1} parent=0 // pred_fallthru
    _
  // Predicated region
  $region22: #{residual_dynamics_forward.1} parent=0 // pred_check
    _
  $region23: #{residual_dynamics_forward.1} parent=0 // pred_check_branch
    %23 = sbr.rel (0) target = $region25
  $region24: #{residual_dynamics_forward.1} parent=0 // pred_region
    _
  $region25: #{residual_dynamics_forward.1} parent=0 // pred_fallthru
    _
  // Predicated region
  $region26: #{residual_dynamics_forward.1} parent=0 // pred_check
    _
  $region27: #{residual_dynamics_forward.1} parent=0 // pred_check_branch
    %25 = sbr.rel (0) target = $region29
  $region28: #{residual_dynamics_forward.1} parent=0 // pred_region
    _
  $region29: #{residual_dynamics_forward.1} parent=0 // pred_fallthru
    _
  %v26 = vld [vmem:[%s0] sm:$0xff]
  %v27 = vld [vmem:[%s1] sm:$0xff]
  %v28 = vld [vmem:[%s1 + $0x8] sm:$0xff]
  %v29 = vld [vmem:[%s1 + $0x10] sm:$0xff]
  %v30 = vld [vmem:[%s1 + $0x18] sm:$0xff]
  %v31 = vld [vmem:[%s2] sm:$0xff]
  %v32 = vld [vmem:[%s2 + $0x8] sm:$0xff]
  %v33 = vld [vmem:[%s2 + $0x10] sm:$0xff]
  %v34 = vld [vmem:[%s2 + $0x18] sm:$0xff]
  %36 = vset.pattern.permute.xlu0 0
  %37 = vperm.xlu0 %36, %v31
  %v38 = vpop.permute.xlu0 %37
  %41 = vset.pattern.permute.xlu0 0
  %42 = vperm.xlu0 %41, %v32
  %v43 = vpop.permute.xlu0 %42
  %46 = vset.pattern.permute.xlu0 0
  %47 = vperm.xlu0 %46, %v33
  %v48 = vpop.permute.xlu0 %47
  %51 = vset.pattern.permute.xlu0 0
  %52 = vperm.xlu0 %51, %v34
  %v53 = vpop.permute.xlu0 %52
  %vm55 = vcmask 64512
  %v57 = vsel %vm55, %v27, 0
  %v60 = vsel %vm55, %v28, 0
  %v63 = vsel %vm55, %v29, 0
  %v66 = vsel %vm55, %v30, 0
  %68 = vmatprep.subr.mxu0 0.0
  %69 = vmatpush1.msra.mxu0 %v26
  %70 = vmatprep.subr.mxu0 0.0
  %71 = vmatpush1.msra.mxu0 0.0
  %72 = vmatprep.subr.mxu0 0.0
  %73 = vmatpush1.msra.mxu0 0.0
  %74 = vmatprep.subr.mxu0 0.0
  %75 = vmatpush1.msra.mxu0 0.0
  %76 = vmatprep.subr.mxu0 0.0
  %77 = vmatpush1.msra.mxu0 0.0
  %78 = vmatprep.subr.mxu0 0.0
  %79 = vmatpush1.msra.mxu0 0.0
  %80 = vmatprep.subr.mxu0 0.0
  %81 = vmatpush1.msra.mxu0 0.0
  %82 = vmatprep.subr.mxu0 0.0
  %83 = vmatpush1.msra.mxu0 0.0
  %84 = vmatprep.subr.mxu0 0.0
  %85 = vmatpush1.msra.mxu0 0.0
  %86 = vmatprep.subr.mxu0 0.0
  %87 = vmatpush1.msra.mxu0 0.0
  %88 = vmatprep.subr.mxu0 0.0
  %89 = vmatpush1.msra.mxu0 0.0
  %90 = vmatprep.subr.mxu0 0.0
  %91 = vmatpush1.msra.mxu0 0.0
  %92 = vmatprep.subr.mxu0 0.0
  %93 = vmatpush1.msra.mxu0 0.0
  %94 = vmatprep.subr.mxu0 0.0
  %95 = vmatpush1.msra.mxu0 0.0
  %96 = vmatprep.subr.mxu0 0.0
  %97 = vmatpush1.msra.mxu0 0.0
  %98 = vmatprep.subr.mxu0 0.0
  %99 = vmatpush1.msra.mxu0 0.0
  %100 = vmatprep.subr.mxu0 0.0
  %101 = vmatpush1.msra.mxu0 0.0
  %102 = vmatprep.subr.mxu0 0.0
  %103 = vmatpush1.msra.mxu0 0.0
  %104 = vmatprep.subr.mxu0 0.0
  %105 = vmatpush1.msra.mxu0 0.0
  %106 = vmatprep.subr.mxu0 0.0
  %107 = vmatpush1.msra.mxu0 0.0
  %108 = vmatprep.subr.mxu0 0.0
  %109 = vmatpush1.msra.mxu0 0.0
  %110 = vmatprep.subr.mxu0 0.0
  %111 = vmatpush1.msra.mxu0 0.0
  %112 = vmatprep.subr.mxu0 0.0
  %113 = vmatpush1.msra.mxu0 0.0
  %114 = vmatprep.subr.mxu0 0.0
  %115 = vmatpush1.msra.mxu0 0.0
  %116 = vmatprep.subr.mxu0 0.0
  %117 = vmatpush1.msra.mxu0 0.0
  %118 = vmatprep.subr.mxu0 0.0
  %119 = vmatpush1.msra.mxu0 0.0
  %120 = vmatprep.subr.mxu0 0.0
  %121 = vmatpush1.msra.mxu0 0.0
  %122 = vmatprep.subr.mxu0 0.0
  %123 = vmatpush1.msra.mxu0 0.0
  %124 = vmatprep.subr.mxu0 0.0
  %125 = vmatpush1.msra.mxu0 0.0
  %126 = vmatprep.subr.mxu0 0.0
  %127 = vmatpush1.msra.mxu0 0.0
  %128 = vmatprep.subr.mxu0 0.0
  %129 = vmatpush1.msra.mxu0 0.0
  %130 = vmatprep.subr.mxu0 0.0
  %131 = vmatpush1.msra.mxu0 0.0
  %132 = vmatprep.mubr.f32.mxu0 0.0
  %133 = vmatmul.mubr.f32.gmra.mrb[0].mxu0 %v57
  %v134 = vpop.f32.mrb[0].mxu0
  %v135 = vadd.f32 %v38, %v134
  %v136 = vpop.f32.mrb[0].mxu0
  %137 = vmatprep.mubr.f32.mxu0 0.0
  %138 = vmatmul.mubr.f32.gmra.mrb[0].mxu0 %v60
  %v139 = vpop.f32.mrb[0].mxu0
  %v140 = vadd.f32 %v43, %v139
  %v141 = vpop.f32.mrb[0].mxu0
  %142 = vmatprep.mubr.f32.mxu0 0.0
  %143 = vmatmul.mubr.f32.gmra.mrb[0].mxu0 %v63
  %v144 = vpop.f32.mrb[0].mxu0
  %v145 = vadd.f32 %v48, %v144
  %v146 = vpop.f32.mrb[0].mxu0
  %147 = vmatprep.mubr.f32.mxu0 0.0
  %148 = vmatmul.mubr.f32.gmra.mrb[0].mxu0 %v66
  %v149 = vpop.f32.mrb[0].mxu0
  %v150 = vadd.f32 %v53, %v149
  %v151 = vpop.f32.mrb[0].mxu0
  %152 = vdwg.mxu0
  %v153 = vmax.f32 %v135, 0.0
  %v154 = vmax.f32 %v140, 0.0
  %v155 = vmax.f32 %v145, 0.0
  %v156 = vmax.f32 %v150, 0.0
  %v157 = vld [vmem:[%s3] sm:$0xff]
  %v158 = vld [vmem:[%s3 + $0x8] sm:$0xff]
  %v159 = vld [vmem:[%s3 + $0x10] sm:$0xff]
  %v160 = vld [vmem:[%s3 + $0x18] sm:$0xff]
  %v161 = vld [vmem:[%s4] sm:$0xff]
  %v162 = vld [vmem:[%s4 + $0x8] sm:$0xff]
  %v163 = vld [vmem:[%s4 + $0x10] sm:$0xff]
  %v164 = vld [vmem:[%s4 + $0x18] sm:$0xff]
  %166 = vset.pattern.permute.xlu0 0
  %167 = vperm.xlu0 %166, %v161
  %v168 = vpop.permute.xlu0 %167
  %171 = vset.pattern.permute.xlu0 0
  %172 = vperm.xlu0 %171, %v162
  %v173 = vpop.permute.xlu0 %172
  %176 = vset.pattern.permute.xlu0 0
  %177 = vperm.xlu0 %176, %v163
  %v178 = vpop.permute.xlu0 %177
  %181 = vset.pattern.permute.xlu0 0
  %182 = vperm.xlu0 %181, %v164
  %v183 = vpop.permute.xlu0 %182
  %vm185 = vcmask 261120
  %v187 = vsel %vm185, %v157, 0
  %v190 = vsel %vm185, %v158, 0
  %v193 = vsel %vm185, %v159, 0
  %v196 = vsel %vm185, %v160, 0
  %198 = vmatprep.subr.mxu0 0.0
  %199 = vmatpush1.msra.mxu0 %v153
  %200 = vmatprep.subr.mxu0 0.0
  %201 = vmatpush1.msra.mxu0 %v154
  %202 = vmatprep.subr.mxu0 0.0
  %203 = vmatpush1.msra.mxu0 %v155
  %204 = vmatprep.subr.mxu0 0.0
  %205 = vmatpush1.msra.mxu0 %v156
  %206 = vmatprep.subr.mxu0 0.0
  %207 = vmatpush1.msra.mxu0 0.0
  %208 = vmatprep.subr.mxu0 0.0
  %209 = vmatpush1.msra.mxu0 0.0
  %210 = vmatprep.subr.mxu0 0.0
  %211 = vmatpush1.msra.mxu0 0.0
  %212 = vmatprep.subr.mxu0 0.0
  %213 = vmatpush1.msra.mxu0 0.0
  %214 = vmatprep.subr.mxu0 0.0
  %215 = vmatpush1.msra.mxu0 0.0
  %216 = vmatprep.subr.mxu0 0.0
  %217 = vmatpush1.msra.mxu0 0.0
  %218 = vmatprep.subr.mxu0 0.0
  %219 = vmatpush1.msra.mxu0 0.0
  %220 = vmatprep.subr.mxu0 0.0
  %221 = vmatpush1.msra.mxu0 0.0
  %222 = vmatprep.subr.mxu0 0.0
  %223 = vmatpush1.msra.mxu0 0.0
  %224 = vmatprep.subr.mxu0 0.0
  %225 = vmatpush1.msra.mxu0 0.0
  %226 = vmatprep.subr.mxu0 0.0
  %227 = vmatpush1.msra.mxu0 0.0
  %228 = vmatprep.subr.mxu0 0.0
  %229 = vmatpush1.msra.mxu0 0.0
  %230 = vmatprep.subr.mxu0 0.0
  %231 = vmatpush1.msra.mxu0 0.0
  %232 = vmatprep.subr.mxu0 0.0
  %233 = vmatpush1.msra.mxu0 0.0
  %234 = vmatprep.subr.mxu0 0.0
  %235 = vmatpush1.msra.mxu0 0.0
  %236 = vmatprep.subr.mxu0 0.0
  %237 = vmatpush1.msra.mxu0 0.0
  %238 = vmatprep.subr.mxu0 0.0
  %239 = vmatpush1.msra.mxu0 0.0
  %240 = vmatprep.subr.mxu0 0.0
  %241 = vmatpush1.msra.mxu0 0.0
  %242 = vmatprep.subr.mxu0 0.0
  %243 = vmatpush1.msra.mxu0 0.0
  %244 = vmatprep.subr.mxu0 0.0
  %245 = vmatpush1.msra.mxu0 0.0
  %246 = vmatprep.subr.mxu0 0.0
  %247 = vmatpush1.msra.mxu0 0.0
  %248 = vmatprep.subr.mxu0 0.0
  %249 = vmatpush1.msra.mxu0 0.0
  %250 = vmatprep.subr.mxu0 0.0
  %251 = vmatpush1.msra.mxu0 0.0
  %252 = vmatprep.subr.mxu0 0.0
  %253 = vmatpush1.msra.mxu0 0.0
  %254 = vmatprep.subr.mxu0 0.0
  %255 = vmatpush1.msra.mxu0 0.0
  %256 = vmatprep.subr.mxu0 0.0
  %257 = vmatpush1.msra.mxu0 0.0
  %258 = vmatprep.subr.mxu0 0.0
  %259 = vmatpush1.msra.mxu0 0.0
  %260 = vmatprep.subr.mxu0 0.0
  %261 = vmatpush1.msra.mxu0 0.0
  %262 = vmatprep.mubr.f32.mxu0 0.0
  %263 = vmatmul.mubr.f32.gmra.mrb[0].mxu0 %v187
  %v264 = vpop.f32.mrb[0].mxu0
  %v265 = vadd.f32 %v168, %v264
  %v266 = vpop.f32.mrb[0].mxu0
  %267 = vmatprep.mubr.f32.mxu0 0.0
  %268 = vmatmul.mubr.f32.gmra.mrb[0].mxu0 %v190
  %v269 = vpop.f32.mrb[0].mxu0
  %v270 = vadd.f32 %v173, %v269
  %v271 = vpop.f32.mrb[0].mxu0
  %272 = vmatprep.mubr.f32.mxu0 0.0
  %273 = vmatmul.mubr.f32.gmra.mrb[0].mxu0 %v193
  %v274 = vpop.f32.mrb[0].mxu0
  %v275 = vadd.f32 %v178, %v274
  %v276 = vpop.f32.mrb[0].mxu0
  %277 = vmatprep.mubr.f32.mxu0 0.0
  %278 = vmatmul.mubr.f32.gmra.mrb[0].mxu0 %v196
  %v279 = vpop.f32.mrb[0].mxu0
  %v280 = vadd.f32 %v183, %v279
  %v281 = vpop.f32.mrb[0].mxu0
  %282 = vdwg.mxu0
  %v283 = vmax.f32 %v265, 0.0
  %v284 = vmax.f32 %v270, 0.0
  %v285 = vmax.f32 %v275, 0.0
  %v286 = vmax.f32 %v280, 0.0
  %v287 = vld [vmem:[%s5] sm:$0xf]
  %v288 = vld [vmem:[%s6] sm:$0xf]
  %290 = vset.pattern.permute.xlu0 0
  %291 = vperm.xlu0 %290, %v288
  %v292 = vpop.permute.xlu0 %291
  %v295 = vsel %vm185, %v287, 0
  %297 = vmatprep.subr.mxu0 0.0
  %298 = vmatpush1.msra.mxu0 %v283
  %299 = vmatprep.subr.mxu0 0.0
  %300 = vmatpush1.msra.mxu0 %v284
  %301 = vmatprep.subr.mxu0 0.0
  %302 = vmatpush1.msra.mxu0 %v285
  %303 = vmatprep.subr.mxu0 0.0
  %304 = vmatpush1.msra.mxu0 %v286
  %305 = vmatprep.subr.mxu0 0.0
  %306 = vmatpush1.msra.mxu0 0.0
  %307 = vmatprep.subr.mxu0 0.0
  %308 = vmatpush1.msra.mxu0 0.0
  %309 = vmatprep.subr.mxu0 0.0
  %310 = vmatpush1.msra.mxu0 0.0
  %311 = vmatprep.subr.mxu0 0.0
  %312 = vmatpush1.msra.mxu0 0.0
  %313 = vmatprep.subr.mxu0 0.0
  %314 = vmatpush1.msra.mxu0 0.0
  %315 = vmatprep.subr.mxu0 0.0
  %316 = vmatpush1.msra.mxu0 0.0
  %317 = vmatprep.subr.mxu0 0.0
  %318 = vmatpush1.msra.mxu0 0.0
  %319 = vmatprep.subr.mxu0 0.0
  %320 = vmatpush1.msra.mxu0 0.0
  %321 = vmatprep.subr.mxu0 0.0
  %322 = vmatpush1.msra.mxu0 0.0
  %323 = vmatprep.subr.mxu0 0.0
  %324 = vmatpush1.msra.mxu0 0.0
  %325 = vmatprep.subr.mxu0 0.0
  %326 = vmatpush1.msra.mxu0 0.0
  %327 = vmatprep.subr.mxu0 0.0
  %328 = vmatpush1.msra.mxu0 0.0
  %329 = vmatprep.subr.mxu0 0.0
  %330 = vmatpush1.msra.mxu0 0.0
  %331 = vmatprep.subr.mxu0 0.0
  %332 = vmatpush1.msra.mxu0 0.0
  %333 = vmatprep.subr.mxu0 0.0
  %334 = vmatpush1.msra.mxu0 0.0
  %335 = vmatprep.subr.mxu0 0.0
  %336 = vmatpush1.msra.mxu0 0.0
  %337 = vmatprep.subr.mxu0 0.0
  %338 = vmatpush1.msra.mxu0 0.0
  %339 = vmatprep.subr.mxu0 0.0
  %340 = vmatpush1.msra.mxu0 0.0
  %341 = vmatprep.subr.mxu0 0.0
  %342 = vmatpush1.msra.mxu0 0.0
  %343 = vmatprep.subr.mxu0 0.0
  %344 = vmatpush1.msra.mxu0 0.0
  %345 = vmatprep.subr.mxu0 0.0
  %346 = vmatpush1.msra.mxu0 0.0
  %347 = vmatprep.subr.mxu0 0.0
  %348 = vmatpush1.msra.mxu0 0.0
  %349 = vmatprep.subr.mxu0 0.0
  %350 = vmatpush1.msra.mxu0 0.0
  %351 = vmatprep.subr.mxu0 0.0
  %352 = vmatpush1.msra.mxu0 0.0
  %353 = vmatprep.subr.mxu0 0.0
  %354 = vmatpush1.msra.mxu0 0.0
  %355 = vmatprep.subr.mxu0 0.0
  %356 = vmatpush1.msra.mxu0 0.0
  %357 = vmatprep.subr.mxu0 0.0
  %358 = vmatpush1.msra.mxu0 0.0
  %359 = vmatprep.subr.mxu0 0.0
  %360 = vmatpush1.msra.mxu0 0.0
  %361 = vmatprep.mubr.f32.mxu0 0.0
  %362 = vmatmul.mubr.f32.gmra.mrb[0].mxu0 %v295
  %v363 = vpop.f32.mrb[0].mxu0
  %v364 = vadd.f32 %v292, %v363
  %v365 = vpop.f32.mrb[0].mxu0
  %366 = vdwg.mxu0
  %v367 = vadd.f32 %v26, %v364
  %368 = vst [vmem:[%s7] sm:$0xf] %v367
  // Predicated region
  $region30: #{residual_dynamics_forward.1} parent=0 // pred_check
    _
  $region31: #{residual_dynamics_forward.1} parent=0 // pred_check_branch
    %370 = sbr.rel (0) target = $region33
  $region32: #{residual_dynamics_forward.1} parent=0 // pred_region
    _
  $region33: #{residual_dynamics_forward.1} parent=0 // pred_fallthru
    _
  // Predicated region
  $region34: #{residual_dynamics_forward.1} parent=0 // pred_check
    _
  $region35: #{residual_dynamics_forward.1} parent=0 // pred_check_branch
    %372 = sbr.rel (0) target = $region37
  $region36: #{residual_dynamics_forward.1} parent=0 // pred_region
    _
  $region37: #{residual_dynamics_forward.1} parent=0 // pred_fallthru
    _

</llo_original>
